<compile_context>
chip_gen: v5e
topology: v5e:2x2
jax: 0.10.0
libtpu: 0.0.40
codegen_flags: <defaults>
</compile_context>

<pallas_src>
import functools

import jax
import jax.numpy as jnp
from jax.experimental import pallas as pl
from jax.experimental.pallas import tpu as pltpu

SCALE_FACTOR = 1.0 / 0.6          # matches ScaledSiLU.scale_factor
_HALF_SCALE = 0.5 * SCALE_FACTOR


def _scaled_silu_math(x):
    # x * sigmoid(x) * scale, with sigmoid(x) = 0.5*(tanh(x/2)+1) folded into
    # the scale: a single EUP transcendental + 2 VPU muls + 1 add per vreg.
    return (_HALF_SCALE * x) * (jnp.tanh(0.5 * x) + 1.0)


def _scaled_silu_kernel(x_ref, o_ref, *, compute_dtype):
    x = x_ref[...].astype(compute_dtype)
    o_ref[...] = _scaled_silu_math(x).astype(o_ref.dtype)


def _vmem_capacity_bytes():
    """Per-core VMEM capacity; conservative 64 MiB (v7x) if the query fails."""
    try:
        return int(pltpu.get_tpu_info().vmem_capacity_bytes)
    except Exception:  # pragma: no cover - AOT / non-TPU tracing fallback
        return 64 << 20


def _choose_2d_view(shape, n):
    """Pick a zero-copy 2-D (rows, cols) lane-dense view of the flat data.

    Returns (rows, cols, pad): `pad` is the number of trailing elements that
    must be zero-padded (last resort only; 0 in all common cases).
    """
    last = shape[-1] if len(shape) >= 1 else n
    # (b) Largest power-of-two lane width that exactly divides n (free reshape).
    po2 = next((lw for lw in (2048, 1024, 512, 256, 128) if n % lw == 0), None)
    # (a) Natural trailing dim if it is already lane-aligned (free collapse of
    # the leading dims) and not absurdly wide.
    natural_ok = len(shape) >= 1 and 128 <= last <= 4096 and last % 128 == 0
    if natural_ok and (po2 is None or last > po2):
        return n // last, last, 0
    if po2 is not None:
        return n // po2, po2, 0
    # n is not a multiple of 128. Keep the natural trailing dim (still zero
    # extra HBM passes; only the ragged 128-lane group gets masked stores) as
    # long as it is wide enough to keep lane occupancy reasonable.
    if len(shape) >= 2 and last >= 128:
        return n // last, last, 0
    # Last resort (misaligned 1-D / tiny trailing dim): pad the flat tail.
    pad = (-n) % 128
    return (n + pad) // 128, 128, pad


def scaled_silu(x, *, compute_dtype=None, block_bytes_target=8 << 20,
                min_pallas_bytes=1 << 18):
    """ScaledSiLU forward: SiLU(x) * (1/0.6). Shape/dtype preserving."""
    x = jnp.asarray(x)
    orig_shape = x.shape
    orig_dtype = x.dtype
    n = x.size

    if compute_dtype is None:
        # f32 everywhere by default: matches the f32 reference on every
        # generation (v5e has no bf16 VPU/EUP). On v6e/v7x a caller may pass
        # jnp.bfloat16 explicitly to halve vreg pressure.
        compute_dtype = jnp.float32
    compute_dtype = jnp.dtype(compute_dtype)

    # Small-input fast path: pallas_call fixed overhead dominates tiny tensors;
    # pass min_pallas_bytes=0 to force the Pallas path (used by the demo).
    if n == 0 or n * orig_dtype.itemsize < min_pallas_bytes:
        return _scaled_silu_math(x.astype(compute_dtype)).astype(orig_dtype)

    rows, cols, pad = _choose_2d_view(orig_shape, n)
    if pad:
        # TODO(synk): only hit for misaligned 1-D / <128-wide inputs; padding
        # costs an extra HBM pass and is kept strictly as a last resort.
        x2 = jnp.pad(x.reshape(-1), (0, pad)).reshape(rows, cols)
    else:
        x2 = x.reshape(rows, cols)        # layout-preserving, free

    itemsize = orig_dtype.itemsize

    # Generation-aware VMEM budget: clamp the BLOCK (not the limit) so that
    # 4*block (in+out, double-buffered) + 4 MiB headroom fits comfortably
    # under the per-generation capacity.
    vmem_cap = _vmem_capacity_bytes()                        # 64 MiB v7x, 128 MiB v5e/v6e
    vmem_budget = min(max(vmem_cap - (16 << 20), 16 << 20), 96 << 20)
    max_block_bytes = max((vmem_budget - (4 << 20)) // 4, 128 * 1024)
    block_bytes = min(block_bytes_target, max_block_bytes)

    # Rows per block from the byte budget (bf16 automatically gets 2x rows).
    row_bytes = cols * itemsize
    tr_budget = max(8, (block_bytes // row_bytes) // 8 * 8)

    if rows <= tr_budget:
        if rows >= 16:
            # Whole tensor would fit one block: split into 2 balanced blocks so
            # both v7x TensorCores get work under dimension_semantics=
            # ("parallel",). Harmless on single-TC v5e/v6e.
            tr = ((pl.cdiv(rows, 2) + 7) // 8) * 8
        else:
            tr = rows          # block == full dim -> always a legal block shape
    else:
        tr = tr_budget
    grid = (pl.cdiv(rows, tr),)

    actual_block = tr * row_bytes
    vmem_limit = int(min(max(4 * actual_block + (4 << 20), 16 << 20), vmem_budget))

    kernel = functools.partial(_scaled_silu_kernel, compute_dtype=compute_dtype)

    out2 = pl.pallas_call(
        kernel,
        out_shape=jax.ShapeDtypeStruct((rows, cols), orig_dtype),
        grid_spec=pltpu.PrefetchScalarGridSpec(
            num_scalar_prefetch=0,
            grid=grid,
            in_specs=[pl.BlockSpec((tr, cols), lambda i: (i, 0))],
            out_specs=pl.BlockSpec((tr, cols), lambda i: (i, 0)),
        ),
        compiler_params=pltpu.CompilerParams(
            dimension_semantics=("parallel",),
            vmem_limit_bytes=vmem_limit,
        ),
        cost_estimate=pl.CostEstimate(
            flops=4 * n,
            transcendentals=n,
            bytes_accessed=2 * n * itemsize,
        ),
    )(x2)

    if pad:
        return out2.reshape(-1)[:n].reshape(orig_shape)
    return out2.reshape(orig_shape)


def scaled_silu_ref(x):
    xf = x.astype(jnp.float32)
    return (xf * jax.nn.sigmoid(xf) * SCALE_FACTOR).astype(x.dtype)


if __name__ == "__main__":
    key = jax.random.PRNGKey(0)
    # Node-feature shape consistent with ScaledSiLU usage: [num_nodes, hidden] = [8, 32]
    x = jax.random.normal(key, (8, 32), dtype=jnp.float32)
    out = jax.block_until_ready(scaled_silu(x, min_pallas_bytes=0))  # force Pallas path
    ref = scaled_silu_ref(x)
    assert out.shape == x.shape and out.dtype == x.dtype
    assert jnp.allclose(out, ref, atol=1e-5, rtol=1e-5)

    # Misaligned shape: exercises the ZERO-COPY natural-trailing-dim view
    # (no pad / no output slice) and the multi-block, >=2-step parallel grid.
    x_big = jax.random.normal(jax.random.PRNGKey(1), (200, 300), dtype=jnp.float32)
    out_big = jax.block_until_ready(scaled_silu(x_big, min_pallas_bytes=0))
    assert out_big.shape == x_big.shape
    assert jnp.allclose(out_big, scaled_silu_ref(x_big), atol=1e-5, rtol=1e-5)

    # bf16 input (f32 compute by default): documents/tests the precision choice.
    x_bf16 = jax.random.normal(jax.random.PRNGKey(2), (64, 256), dtype=jnp.bfloat16)
    out_bf16 = jax.block_until_ready(scaled_silu(x_bf16, min_pallas_bytes=0))
    ref_bf16 = scaled_silu_ref(x_bf16)
    assert out_bf16.dtype == jnp.bfloat16
    assert jnp.allclose(out_bf16.astype(jnp.float32), ref_bf16.astype(jnp.float32),
                        atol=1e-2, rtol=1e-2)

    print("KERNEL_OK")
</pallas_src>

<mosaic_0001>
module attributes {stable_mosaic.version = 11 : i64} {
  func.func @_scaled_silu_kernel(%arg0: i32, %arg1: memref<1x256xf32, #tpu.memory_space<vmem>>, %arg2: memref<1x256xf32, #tpu.memory_space<vmem>>) attributes {dimension_semantics = [#tpu.dimension_semantics<parallel>], iteration_bounds = array<i64: 1>, scalar_prefetch = 0 : i64, scratch_operands = 0 : i64, tpu.core_type = #tpu.core_type<tc>, window_params = [{transform_indices = @transform_0, window_bounds = array<i64: 1, 256>}, {transform_indices = @transform_1, window_bounds = array<i64: 1, 256>}]} {
    %c0 = arith.constant 0 : index
    %c0_0 = arith.constant 0 : index
    %0 = vector.load %arg1[%c0, %c0_0] : memref<1x256xf32, #tpu.memory_space<vmem>>, vector<1x256xf32>
    %cst = arith.constant 0.833333313 : f32
    %1 = vector.broadcast %cst : f32 to vector<1x256xf32>
    %2 = arith.mulf %1, %0 : vector<1x256xf32>
    %cst_1 = arith.constant 5.000000e-01 : f32
    %3 = vector.broadcast %cst_1 : f32 to vector<1x256xf32>
    %4 = arith.mulf %3, %0 : vector<1x256xf32>
    %5 = math.tanh %4 : vector<1x256xf32>
    %cst_2 = arith.constant 1.000000e+00 : f32
    %6 = vector.broadcast %cst_2 : f32 to vector<1x256xf32>
    %7 = arith.addf %5, %6 : vector<1x256xf32>
    %8 = arith.mulf %2, %7 : vector<1x256xf32>
    %c0_3 = arith.constant 0 : index
    %c0_4 = arith.constant 0 : index
    %9 = vector.load %arg2[%c0_3, %c0_4] : memref<1x256xf32, #tpu.memory_space<vmem>>, vector<1x256xf32>
    tpu.vector_store %arg2[%c0_3, %c0_4], %8 {strides = array<i32>} : memref<1x256xf32, #tpu.memory_space<vmem>>, vector<1x256xf32>,
    return
  }
  func.func @transform_0(%arg0: i32) -> (i32, i32) {
    %c0_i32 = arith.constant 0 : i32
    %c0_i32_0 = arith.constant 0 : i32
    return %arg0, %c0_i32 : i32, i32
  }
  func.func @transform_1(%arg0: i32) -> (i32, i32) {
    %c0_i32 = arith.constant 0 : i32
    %c0_i32_0 = arith.constant 0 : i32
    return %arg0, %c0_i32 : i32, i32
  }
}

</mosaic_0001>

<llo_original>
// kernel: tpu_custom_call.1
$region0: #{tpu_custom_call.1}
  #allocation0 [shape = 'u32[]', space=smem, size = 0x4, offset = 0x4, fixed_abs, tag = 'smem constant byte address 0x4 - core index']
  #allocation1 [shape = 'u32[72,128]{1,0:T(1,128)}', space=vmem, size = 0x9000, scoped, tag = 'internal scratch']
  %s0 = inlined_call_operand.hbm [shape: f32[1,256], index: 0, kind: input, shape index: {}]
  %s1 = inlined_call_operand.hbm [shape: f32[1,256], index: 1, kind: output, shape index: {}]
  %s2 = sld [smem:[#allocation0]]
  $region18: #{tpu_custom_call.1} parent=0
    _
  %s4 = ssub.s32 1, %s2
  %s5 = scalar_select 0, %s4, %s2
  $region1: #{tpu_custom_call.1} parent=0
    #allocation2 [shape = 'u8[1024]{0}', space=vmem, size = 0x400, scoped, tag = 'input window, operand 0, single buffered']
    #allocation3 [shape = 's32[1]{0}', space=sflag, size = 0x4, scoped, tag = 'scoped memory for tpu_custom_call.1']
    #allocation4 [shape = 's32[1]{0}', space=sflag, size = 0x4, scoped, tag = 'scoped memory for tpu_custom_call.1']
    #allocation5 [shape = 'u8[1024]{0}', space=vmem, size = 0x400, scoped, tag = 'output window, operand 0, single buffered']
    %6 = vsyncpa [#allocation3], 0
    %7 = vsyncpa [#allocation4], 0
    // Predicated region
    $region2: #{tpu_custom_call.1} parent=1 // pred_check
      _
    $region3: #{tpu_custom_call.1} parent=1 // pred_check_branch
      %9 = sbr.rel (0) target = $region5
    $region4: #{tpu_custom_call.1} parent=1 // pred_region
      %11 = vsyncadd [#allocation3], 0
      %s13 = sshll.u32 %s0, 4
      %s14 = int_to_ptr.hbm [resolvable:$true] %s13
      %s15 = sshll.u32 [#allocation2], 4
      %s16 = int_to_ptr.vmem [resolvable:$true] %s15
      %18 = dma.hbm_to_vmem [thread:$0]  %s14, 32, %s16, [#allocation3]
    $region5: #{tpu_custom_call.1} parent=1 // pred_fallthru
      _
    // Predicated region
    $region6: #{tpu_custom_call.1} parent=1 // pred_check
      _
    $region7: #{tpu_custom_call.1} parent=1 // pred_check_branch
      %20 = sbr.rel (0) target = $region9
    $region8: #{tpu_custom_call.1} parent=1 // pred_region
      %22 = dma.done [#allocation3], 32
    $region9: #{tpu_custom_call.1} parent=1 // pred_fallthru
      _
    %v23 = vld [vmem:[#allocation2] sm:$0x3]
    %v24 = vmul.f32 %v23, 0.8333333
    %v25 = vmul.f32 %v23, 0.5
    %v26 = vtanh.pop %v25
    %v27 = vadd.f32 %v26, 1.0
    %v28 = vmul.f32 %v24, %v27
    %v29 = vlaneseq
    %vm30 = vcmp.ge.s32.totalorder %v29, 0
    %vm31 = vcmp.lt.s32.totalorder %v29, 256
    %vm32 = vmand %vm30, %vm31
    %33 = vst.msk [vmem:[#allocation5] sm:$0x3] %vm32, %v28
    // Predicated region
    $region10: #{tpu_custom_call.1} parent=1 // pred_check
      _
    $region11: #{tpu_custom_call.1} parent=1 // pred_check_branch
      %35 = sbr.rel (0) target = $region13
    $region12: #{tpu_custom_call.1} parent=1 // pred_region
      %37 = vsyncadd [#allocation4], 0
      %s39 = sshll.u32 [#allocation5], 4
      %s40 = int_to_ptr.vmem [resolvable:$true] %s39
      %s41 = sshll.u32 %s1, 4
      %s42 = int_to_ptr.hbm [resolvable:$true] %s41
      %44 = dma.vmem_to_hbm [thread:$0]  %s40, 32, %s42, [#allocation4]
    $region13: #{tpu_custom_call.1} parent=1 // pred_fallthru
      _
    // Predicated region
    $region14: #{tpu_custom_call.1} parent=1 // pred_check
      _
    $region15: #{tpu_custom_call.1} parent=1 // pred_check_branch
      %46 = sbr.rel (0) target = $region17
    $region16: #{tpu_custom_call.1} parent=1 // pred_region
      %48 = dma.done [#allocation4], 32
    $region17: #{tpu_custom_call.1} parent=1 // pred_fallthru
      _
    %49 = vsyncpa [#allocation3], 1
    %50 = vsyncpa [#allocation4], 1

</llo_original>
